<compile_context>
chip_gen: v7x
topology: tpu7x:2x2x1
jax: 0.10.0
libtpu: 0.0.40
codegen_flags: <defaults>
</compile_context>

<pallas_src>
import functools

import jax
import jax.numpy as jnp
from jax.experimental import pallas as pl
from jax.experimental.pallas import tpu as pltpu


_LANE = 128
_SUB = 16          # sublane multiple that is safe for both f32 and bf16 blocks


def _round_up(n, m):
    return -(-n // m) * m


def _vmem_capacity_bytes():
    try:
        return int(pltpu.get_tpu_info().vmem_capacity_bytes)
    except Exception:
        return 64 * 1024 * 1024      # conservative (v7x per-core VMEM)


@functools.lru_cache(maxsize=1)
def _single_buffering_supported():
    """Probe whether pipeline_mode=pl.Buffered(1) lowers on this jax/libtpu."""
    if not hasattr(pl, "Buffered"):
        return False
    try:
        def _probe_kernel(x_ref, o_ref):
            o_ref[...] = x_ref[...] + 1.0

        fn = pl.pallas_call(
            _probe_kernel,
            out_shape=jax.ShapeDtypeStruct((8, 128), jnp.float32),
            grid=(1,),
            in_specs=[pl.BlockSpec((8, 128), lambda i: (0, 0),
                                   pipeline_mode=pl.Buffered(1))],
            out_specs=pl.BlockSpec((8, 128), lambda i: (0, 0)),
        )
        jax.block_until_ready(fn(jnp.zeros((8, 128), jnp.float32)))
        return True
    except Exception:
        return False


def _invariant_spec(block_shape):
    """BlockSpec for a grid-invariant operand; single-buffered when supported."""
    index_map = lambda i: (0, 0)
    if _single_buffering_supported():
        return pl.BlockSpec(block_shape, index_map,
                            pipeline_mode=pl.Buffered(1)), 1
    return pl.BlockSpec(block_shape, index_map), 2


def _pick_row_tile(n_rows, *, fixed_bytes, bytes_per_row, budget_bytes,
                   cap=1024, want_two_steps=False):
    """Largest row tile (multiple of 16) fitting the VMEM budget."""
    avail = budget_bytes - fixed_bytes
    tm = max(_SUB, avail // max(bytes_per_row, 1))
    tm = min(tm, cap)
    if want_two_steps and n_rows > _SUB:
        # Keep >= 2 grid steps so v7x megacore can shard the "parallel" axis.
        tm = min(tm, _round_up(-(-n_rows // 2), _SUB))
    tm = min(tm, _round_up(n_rows, _SUB))
    tm = max(_SUB, (tm // _SUB) * _SUB)
    return int(tm)


# ----------------------------- kernels ------------------------------------ #

def _fused_kernel(x_ref, adj_ref, thr_ref, proj_ref, o_ref):
    # Single-block path for small problems: mask -> softmax -> two matmuls.
    adj = adj_ref[...]
    masked = jnp.where(adj >= thr_ref[...], adj, 0.0)   # zeros stay in softmax
    row_max = jnp.max(masked, axis=-1, keepdims=True)
    e = jnp.exp(masked - row_max)
    p = e / jnp.sum(e, axis=-1, keepdims=True)
    t = jnp.dot(x_ref[...], p, preferred_element_type=jnp.float32)
    o_ref[...] = jnp.dot(t, proj_ref[...],
                         preferred_element_type=jnp.float32).astype(o_ref.dtype)


def _fold_kernel(adj_ref, thr_ref, proj_ref, w_ref):
    # One-shot (outside the hot loop): W = softmax(adj * topk_mask) @ out_proj.
    # Masked-out entries are 0 (NOT -inf) and still contribute exp(0 - max) to
    # the denominator, matching the PyTorch reference exactly.
    adj = adj_ref[...]
    masked = jnp.where(adj >= thr_ref[...], adj, 0.0)
    row_max = jnp.max(masked, axis=-1, keepdims=True)
    e = jnp.exp(masked - row_max)
    p = e / jnp.sum(e, axis=-1, keepdims=True)
    w_ref[...] = jnp.dot(p, proj_ref[...],
                         preferred_element_type=jnp.float32).astype(w_ref.dtype)


def _gemm_kernel(x_ref, w_ref, o_ref):
    # Hot path: one MXU matmul per row tile, f32 accumulation.
    o_ref[...] = jnp.dot(x_ref[...], w_ref[...],
                         preferred_element_type=jnp.float32).astype(o_ref.dtype)


# ----------------------------- wrapper ------------------------------------ #

def graph_module_forward(x, adj_weight, out_proj, sparse_k, *,
                         gemm_dtype=jnp.bfloat16, force_tiled=False):
    """GraphModule.forward: (B, C, Nx) -> (B, C, Ny)."""
    B, C, Nx = x.shape
    Ny = out_proj.shape[-1]
    M = B * C
    out_dtype = x.dtype

    # Per-row top-k threshold (replaces the scatter mask AND the masked-adjacency
    # HBM round-trip); the compare is a cheap VPU op inside the kernels.
    # TODO(synk): exact ties at the k-th value select >k entries here, whereas
    # torch.topk breaks ties by index; irrelevant for continuous random weights.
    thr = jax.lax.top_k(adj_weight, sparse_k)[0][:, sparse_k - 1:sparse_k]  # (Nx, 1)

    # Below ~1 MiB of (double-buffered f32) operands, a single grid=(1,) kernel
    # beats the multi-launch pipeline (per-step overhead dominates).
    fused_bytes = 8 * (M * Nx + Nx * Nx + Nx + Nx * Ny + M * Ny)
    if M < _SUB or (not force_tiled and fused_bytes <= (1 << 20)):
        out = pl.pallas_call(
            _fused_kernel,
            out_shape=jax.ShapeDtypeStruct((M, Ny), out_dtype),
            grid=(1,),
            in_specs=[
                pl.BlockSpec((M, Nx), lambda i: (0, 0)),
                pl.BlockSpec((Nx, Nx), lambda i: (0, 0)),
                pl.BlockSpec((Nx, 1), lambda i: (0, 0)),
                pl.BlockSpec((Nx, Ny), lambda i: (0, 0)),
            ],
            out_specs=pl.BlockSpec((M, Ny), lambda i: (0, 0)),
        )(x.reshape(M, Nx), adj_weight, thr, out_proj)
        return out.reshape(B, C, Ny)

    # -------------------------- tiled path --------------------------------- #
    cap = _vmem_capacity_bytes()
    vmem_limit = max(min(cap * 3 // 4, 100 * 1024 * 1024), 32 * 1024 * 1024)
    budget = max(cap * 2 // 5, 16 * 1024 * 1024)   # tile budget w/ headroom

    # Lane-dense output: pad Ny up to a multiple of 128 so the hot GEMM issues
    # full (unmasked) vector stores; zero columns are sliced off at the end.
    ny_pad = _round_up(Ny, _LANE)
    proj_p = out_proj if ny_pad == Ny else jnp.pad(
        out_proj, ((0, 0), (0, ny_pad - Ny)))

    w_itemsize = jnp.dtype(gemm_dtype).itemsize
    f32 = 4

    # --- one-shot fold: W = softmax(masked adj) @ out_proj, row-tiled so the
    #     full (Nx, Nx) adjacency never has to fit VMEM at once. ---
    proj_spec, proj_bufs = _invariant_spec((Nx, ny_pad))
    if Nx <= 512:
        tr = Nx                                   # full-dim blocks, no tiling
    else:
        tr = _pick_row_tile(
            Nx,
            fixed_bytes=proj_bufs * Nx * ny_pad * f32,
            bytes_per_row=2 * Nx * f32 + 2 * f32 + 2 * ny_pad * w_itemsize,
            budget_bytes=budget, cap=512)
    w = pl.pallas_call(
        _fold_kernel,
        out_shape=jax.ShapeDtypeStruct((Nx, ny_pad), gemm_dtype),
        grid=(pl.cdiv(Nx, tr),),
        in_specs=[
            pl.BlockSpec((tr, Nx), lambda i: (i, 0)),
            pl.BlockSpec((tr, 1), lambda i: (i, 0)),
            proj_spec,
        ],
        out_specs=pl.BlockSpec((tr, ny_pad), lambda i: (i, 0)),
        compiler_params=pltpu.CompilerParams(
            dimension_semantics=("parallel",),
            vmem_limit_bytes=vmem_limit),
    )(adj_weight, thr, proj_p)
    # TODO(synk): for very large Nx*Ny the resident out_proj should also be
    # tiled over its column axis.

    # --- hot path: x2 @ W over flattened rows; bf16 operands, f32 accumulate.
    #     No jnp.pad(x) / out[:M]: grid = cdiv(M, tm) and Pallas masks the
    #     ragged last row tile's edge writes. ---
    x2 = x.reshape(M, Nx).astype(gemm_dtype)
    w_spec, w_bufs = _invariant_spec((Nx, ny_pad))
    tm = _pick_row_tile(
        M,
        fixed_bytes=w_bufs * Nx * ny_pad * w_itemsize,
        bytes_per_row=2 * Nx * w_itemsize + 2 * ny_pad * f32,
        budget_bytes=budget, cap=1024, want_two_steps=True)
    out = pl.pallas_call(
        _gemm_kernel,
        out_shape=jax.ShapeDtypeStruct((M, ny_pad), jnp.float32),
        grid=(pl.cdiv(M, tm),),
        in_specs=[
            pl.BlockSpec((tm, Nx), lambda i: (i, 0)),   # x rows (tiled, ragged ok)
            w_spec,                                     # folded weight (resident)
        ],
        out_specs=pl.BlockSpec((tm, ny_pad), lambda i: (i, 0)),
        compiler_params=pltpu.CompilerParams(
            dimension_semantics=("parallel",),
            vmem_limit_bytes=vmem_limit),
    )(x2, w)

    if ny_pad != Ny:
        out = out[:, :Ny]
    return out.astype(out_dtype).reshape(B, C, Ny)


# ----------------------------- reference ---------------------------------- #

def _reference(x, adj_weight, out_proj, sparse_k):
    _, idx = jax.lax.top_k(adj_weight, sparse_k)
    rows = jnp.arange(adj_weight.shape[0])[:, None]
    mask = jnp.zeros_like(adj_weight).at[rows, idx].set(1.0)
    adj = jax.nn.softmax(adj_weight * mask, axis=-1)
    hi = jax.lax.Precision.HIGHEST
    t = jnp.einsum("bcn,nk->bck", x, adj, precision=hi)
    return jnp.einsum("bck,ko->bco", t, out_proj, precision=hi)


if __name__ == "__main__":
    key = jax.random.PRNGKey(0)
    k1, k2, k3, k4, k5, k6 = jax.random.split(key, 6)

    # --- tiny shapes (single fused grid=(1,) kernel path) ---
    B, C, Nx, Ny, sparse_k = 2, 4, 8, 16, 4
    adj_w = jax.random.normal(k1, (Nx, Nx), jnp.float32) / Nx ** 0.5
    proj = jax.random.normal(k2, (Nx, Ny), jnp.float32) / Nx ** 0.5
    x = jax.random.normal(k3, (B, C, Nx), jnp.float32)

    out = jax.block_until_ready(graph_module_forward(x, adj_w, proj, sparse_k))
    ref = _reference(x, adj_w, proj, sparse_k)
    assert out.shape == (B, C, Ny), out.shape
    # Tolerance covers MXU default-precision (bf16-pass) f32 matmuls.
    assert jnp.allclose(out, ref, atol=2e-2, rtol=2e-2), "tiny path mismatch"

    # --- medium shapes: exercises the tiled path (ragged M, lane-padded Ny,
    #     bf16 GEMM operands, >= 2 parallel grid steps). ---
    B2, C2, Nx2, Ny2, sparse_k2 = 3, 111, 256, 192, 8
    adj_w2 = jax.random.normal(k4, (Nx2, Nx2), jnp.float32) / Nx2 ** 0.5
    proj2 = jax.random.normal(k5, (Nx2, Ny2), jnp.float32) / Nx2 ** 0.5
    x2 = jax.random.normal(k6, (B2, C2, Nx2), jnp.float32)

    out2 = jax.block_until_ready(
        graph_module_forward(x2, adj_w2, proj2, sparse_k2, force_tiled=True))
    ref2 = _reference(x2, adj_w2, proj2, sparse_k2)
    assert out2.shape == (B2, C2, Ny2), out2.shape
    # bf16 operands + reassociated fold => loosened tolerance.
    assert jnp.allclose(out2, ref2, atol=2e-2, rtol=2e-2), "tiled path mismatch"

    print("KERNEL_OK")
</pallas_src>

<mosaic_0001>
module attributes {stable_mosaic.version = 11 : i64} {
  func.func @_fused_kernel(%arg0: i32, %arg1: memref<8x8xf32, #tpu.memory_space<vmem>>, %arg2: memref<8x8xf32, #tpu.memory_space<vmem>>, %arg3: memref<8x1xf32, #tpu.memory_space<vmem>>, %arg4: memref<8x16xf32, #tpu.memory_space<vmem>>, %arg5: memref<8x16xf32, #tpu.memory_space<vmem>>) attributes {dimension_semantics = [#tpu.dimension_semantics<arbitrary>], iteration_bounds = array<i64: 1>, scalar_prefetch = 0 : i64, scratch_operands = 0 : i64, tpu.core_type = #tpu.core_type<tc>, window_params = [{pipeline_mode = #tpu.pipeline_mode<synchronous>, transform_indices = @transform_0, window_bounds = array<i64: 8, 8>}, {pipeline_mode = #tpu.pipeline_mode<synchronous>, transform_indices = @transform_1, window_bounds = array<i64: 8, 8>}, {pipeline_mode = #tpu.pipeline_mode<synchronous>, transform_indices = @transform_2, window_bounds = array<i64: 8, 1>}, {pipeline_mode = #tpu.pipeline_mode<synchronous>, transform_indices = @transform_3, window_bounds = array<i64: 8, 16>}, {pipeline_mode = #tpu.pipeline_mode<synchronous>, transform_indices = @transform_4, window_bounds = array<i64: 8, 16>}]} {
    %c0 = arith.constant 0 : index
    %c0_0 = arith.constant 0 : index
    %0 = vector.load %arg2[%c0, %c0_0] : memref<8x8xf32, #tpu.memory_space<vmem>>, vector<8x8xf32>
    %c0_1 = arith.constant 0 : index
    %c0_2 = arith.constant 0 : index
    %1 = vector.load %arg3[%c0_1, %c0_2] : memref<8x1xf32, #tpu.memory_space<vmem>>, vector<8x1xf32>
    %2 = vector.broadcast %1 : vector<8x1xf32> to vector<8x8xf32>
    %3 = arith.cmpf oge, %0, %2 : vector<8x8xf32>
    %cst = arith.constant 0.000000e+00 : f32
    %4 = vector.broadcast %cst : f32 to vector<8x8xf32>
    %5 = arith.select %3, %0, %4 : vector<8x8xi1>, vector<8x8xf32>
    %cst_3 = arith.constant dense<0xFF800000> : vector<8xf32>
    %6 = vector.multi_reduction <maximumf>, %5, %cst_3 [1] : vector<8x8xf32> to vector<8xf32>
    %7 = vector.shape_cast %6 : vector<8xf32> to vector<8x1xf32>
    %8 = vector.broadcast %7 : vector<8x1xf32> to vector<8x8xf32>
    %9 = arith.subf %5, %8 : vector<8x8xf32>
    %10 = math.exp %9 : vector<8x8xf32>
    %cst_4 = arith.constant dense<0.000000e+00> : vector<8xf32>
    %11 = vector.multi_reduction <add>, %10, %cst_4 [1] : vector<8x8xf32> to vector<8xf32>
    %12 = vector.shape_cast %11 : vector<8xf32> to vector<8x1xf32>
    %13 = vector.broadcast %12 : vector<8x1xf32> to vector<8x8xf32>
    %14 = arith.divf %10, %13 : vector<8x8xf32>
    %c0_5 = arith.constant 0 : index
    %c0_6 = arith.constant 0 : index
    %15 = vector.load %arg1[%c0_5, %c0_6] : memref<8x8xf32, #tpu.memory_space<vmem>>, vector<8x8xf32>
    %cst_7 = arith.constant dense<0.000000e+00> : vector<8x8xf32>
    %16 = tpu.matmul %15, %14, %cst_7 {dimension_numbers = #tpu.dot_dimension_numbers<[1], [0], [0], [1], [0, 0, 1, 1], [], []>} : vector<8x8xf32>, vector<8x8xf32>, vector<8x8xf32> -> vector<8x8xf32>
    %c0_8 = arith.constant 0 : index
    %c0_9 = arith.constant 0 : index
    %17 = vector.load %arg4[%c0_8, %c0_9] : memref<8x16xf32, #tpu.memory_space<vmem>>, vector<8x16xf32>
    %cst_10 = arith.constant dense<0.000000e+00> : vector<8x16xf32>
    %18 = tpu.matmul %16, %17, %cst_10 {dimension_numbers = #tpu.dot_dimension_numbers<[1], [0], [0], [1], [0, 0, 1, 1], [], []>} : vector<8x8xf32>, vector<8x16xf32>, vector<8x16xf32> -> vector<8x16xf32>
    %c0_11 = arith.constant 0 : index
    %c0_12 = arith.constant 0 : index
    %19 = vector.load %arg5[%c0_11, %c0_12] : memref<8x16xf32, #tpu.memory_space<vmem>>, vector<8x16xf32>
    tpu.vector_store %arg5[%c0_11, %c0_12], %18 {strides = array<i32>} : memref<8x16xf32, #tpu.memory_space<vmem>>, vector<8x16xf32>,
    return
  }
  func.func @transform_0(%arg0: i32) -> (i32, i32) {
    %c0_i32 = arith.constant 0 : i32
    %c0_i32_0 = arith.constant 0 : i32
    %c0_i32_1 = arith.constant 0 : i32
    return %c0_i32, %c0_i32_0 : i32, i32
  }
  func.func @transform_1(%arg0: i32) -> (i32, i32) {
    %c0_i32 = arith.constant 0 : i32
    %c0_i32_0 = arith.constant 0 : i32
    %c0_i32_1 = arith.constant 0 : i32
    return %c0_i32, %c0_i32_0 : i32, i32
  }
  func.func @transform_2(%arg0: i32) -> (i32, i32) {
    %c0_i32 = arith.constant 0 : i32
    %c0_i32_0 = arith.constant 0 : i32
    %c0_i32_1 = arith.constant 0 : i32
    return %c0_i32, %c0_i32_0 : i32, i32
  }
  func.func @transform_3(%arg0: i32) -> (i32, i32) {
    %c0_i32 = arith.constant 0 : i32
    %c0_i32_0 = arith.constant 0 : i32
    %c0_i32_1 = arith.constant 0 : i32
    return %c0_i32, %c0_i32_0 : i32, i32
  }
  func.func @transform_4(%arg0: i32) -> (i32, i32) {
    %c0_i32 = arith.constant 0 : i32
    %c0_i32_0 = arith.constant 0 : i32
    %c0_i32_1 = arith.constant 0 : i32
    return %c0_i32, %c0_i32_0 : i32, i32
  }
}

</mosaic_0001>

<llo_original>
// kernel: tpu_custom_call.1
$region0: #{tpu_custom_call.1}
  #allocation0 [shape = 'u32[]', space=smem, size = 0x4, offset = 0x4, fixed_abs, tag = 'smem constant byte address 0x4 - core index']
  #allocation1 [shape = 'u32[144,128]{1,0:T(1,128)}', space=vmem, size = 0x12000, scoped, tag = 'internal scratch']
  %s0 = inlined_call_operand.vmem [shape: f32[8,8], index: 0, kind: input, shape index: {}]
  %s1 = inlined_call_operand.hbm [shape: f32[8,8], index: 1, kind: input, shape index: {}]
  %s2 = inlined_call_operand.vmem [shape: f32[8,1], index: 2, kind: input, shape index: {}]
  %s3 = inlined_call_operand.vmem [shape: f32[8,16], index: 3, kind: input, shape index: {}]
  %s4 = inlined_call_operand.hbm [shape: f32[8,16], index: 4, kind: output, shape index: {}]
  %s5 = sld [smem:[#allocation0]]
  $region30: #{tpu_custom_call.1} parent=0
    _
  %s7 = ssub.s32 1, %s5
  %s8 = scalar_select 0, %s7, %s5
  $region1: #{tpu_custom_call.1} parent=0
    #allocation2 [shape = 'u8[4096]{0}', space=vmem, size = 0x1000, scoped, tag = 'input window, operand 1, single buffered']
    #allocation3 [shape = 's32[1]{0}', space=sflag, size = 0x4, scoped, tag = 'scoped memory for tpu_custom_call.1']
    #allocation4 [shape = 's32[1]{0}', space=sflag, size = 0x4, scoped, tag = 'scoped memory for tpu_custom_call.1']
    #allocation5 [shape = 'u8[4096]{0}', space=vmem, size = 0x1000, scoped, tag = 'output window, operand 0, single buffered']
    %9 = vsyncpa [#allocation3], 0
    %10 = vsyncpa [#allocation4], 0
    // Predicated region
    $region2: #{tpu_custom_call.1} parent=1 // pred_check
      _
    $region3: #{tpu_custom_call.1} parent=1 // pred_check_branch
      %12 = sbr.rel (0) target = $region5
    $region4: #{tpu_custom_call.1} parent=1 // pred_region
      _
    $region5: #{tpu_custom_call.1} parent=1 // pred_fallthru
      _
    // Predicated region
    $region6: #{tpu_custom_call.1} parent=1 // pred_check
      _
    $region7: #{tpu_custom_call.1} parent=1 // pred_check_branch
      %14 = sbr.rel (0) target = $region9
    $region8: #{tpu_custom_call.1} parent=1 // pred_region
      %s16 = ssub.s32 128, 128
      %17 = vsyncadd [#allocation3], %s16
      %s19 = sshll.u32 [#allocation2], 4
      %s20 = int_to_ptr.vmem [resolvable:$true] %s19
      %22 = dma.hbm_to_vmem [thread:$0]  %s1, 128, %s20, [#allocation3]
    $region9: #{tpu_custom_call.1} parent=1 // pred_fallthru
      _
    // Predicated region
    $region10: #{tpu_custom_call.1} parent=1 // pred_check
      _
    $region11: #{tpu_custom_call.1} parent=1 // pred_check_branch
      %24 = sbr.rel (0) target = $region13
    $region12: #{tpu_custom_call.1} parent=1 // pred_region
      _
    $region13: #{tpu_custom_call.1} parent=1 // pred_fallthru
      _
    // Predicated region
    $region14: #{tpu_custom_call.1} parent=1 // pred_check
      _
    $region15: #{tpu_custom_call.1} parent=1 // pred_check_branch
      %26 = sbr.rel (0) target = $region17
    $region16: #{tpu_custom_call.1} parent=1 // pred_region
      _
    $region17: #{tpu_custom_call.1} parent=1 // pred_fallthru
      _
    // Predicated region
    $region18: #{tpu_custom_call.1} parent=1 // pred_check
      _
    $region19: #{tpu_custom_call.1} parent=1 // pred_check_branch
      %28 = sbr.rel (0) target = $region21
    $region20: #{tpu_custom_call.1} parent=1 // pred_region
      %29 = dma.done [#allocation3], 128
    $region21: #{tpu_custom_call.1} parent=1 // pred_fallthru
      _
    %v30 = vld [vmem:[#allocation2] sm:$0xff]
    %v31 = vld [vmem:[%s2] sm:$0xff]
    %33 = vset.pattern.permute.xlu0 0
    %34 = vperm.xlu0 %33, %v31
    %v35 = vpop.permute.xlu0 %34
    %vm37 = vcmp.ge.f32.partialorder %v30, %v35
    %v38 = vsel %vm37, %v30, 0.0
    %vm39 = vcmask 64512
    %v40 = vsel %vm39, %v38, -inf
    %41 = vmax.xlane.f32.xlu0 %v40
    %v42 = vpop.xlane.xlu0 %41
    %v43 = vsub.f32 %v38, %v42
    %v44 = vmul.f32 %v43, 1.442695
    %v45 = vpow.pop %v44
    %v46 = vsel %vm39, %v45, 0.0
    %47 = vadd.xlane.f32.xlu0 %v46
    %v48 = vpop.xlane.xlu0 %47
    %v49 = vrcp.pop %v48
    %v50 = vmul.f32 %v45, %v49
    %v51 = vld [vmem:[%s0] sm:$0xff]
    %v53 = vsel %vm39, %v51, 0
    %55 = vmatprep.subr.mxu0 0.0
    %56 = vmatpush1.msra.mxu0 %v50
    %57 = vmatprep.subr.mxu0 0.0
    %58 = vmatpush1.msra.mxu0 0.0
    %59 = vmatprep.subr.mxu0 0.0
    %60 = vmatpush1.msra.mxu0 0.0
    %61 = vmatprep.subr.mxu0 0.0
    %62 = vmatpush1.msra.mxu0 0.0
    %63 = vmatprep.subr.mxu0 0.0
    %64 = vmatpush1.msra.mxu0 0.0
    %65 = vmatprep.subr.mxu0 0.0
    %66 = vmatpush1.msra.mxu0 0.0
    %67 = vmatprep.subr.mxu0 0.0
    %68 = vmatpush1.msra.mxu0 0.0
    %69 = vmatprep.subr.mxu0 0.0
    %70 = vmatpush1.msra.mxu0 0.0
    %71 = vmatprep.subr.mxu0 0.0
    %72 = vmatpush1.msra.mxu0 0.0
    %73 = vmatprep.subr.mxu0 0.0
    %74 = vmatpush1.msra.mxu0 0.0
    %75 = vmatprep.subr.mxu0 0.0
    %76 = vmatpush1.msra.mxu0 0.0
    %77 = vmatprep.subr.mxu0 0.0
    %78 = vmatpush1.msra.mxu0 0.0
    %79 = vmatprep.subr.mxu0 0.0
    %80 = vmatpush1.msra.mxu0 0.0
    %81 = vmatprep.subr.mxu0 0.0
    %82 = vmatpush1.msra.mxu0 0.0
    %83 = vmatprep.subr.mxu0 0.0
    %84 = vmatpush1.msra.mxu0 0.0
    %85 = vmatprep.subr.mxu0 0.0
    %86 = vmatpush1.msra.mxu0 0.0
    %87 = vmatprep.subr.mxu0 0.0
    %88 = vmatpush1.msra.mxu0 0.0
    %89 = vmatprep.subr.mxu0 0.0
    %90 = vmatpush1.msra.mxu0 0.0
    %91 = vmatprep.subr.mxu0 0.0
    %92 = vmatpush1.msra.mxu0 0.0
    %93 = vmatprep.subr.mxu0 0.0
    %94 = vmatpush1.msra.mxu0 0.0
    %95 = vmatprep.subr.mxu0 0.0
    %96 = vmatpush1.msra.mxu0 0.0
    %97 = vmatprep.subr.mxu0 0.0
    %98 = vmatpush1.msra.mxu0 0.0
    %99 = vmatprep.subr.mxu0 0.0
    %100 = vmatpush1.msra.mxu0 0.0
    %101 = vmatprep.subr.mxu0 0.0
    %102 = vmatpush1.msra.mxu0 0.0
    %103 = vmatprep.subr.mxu0 0.0
    %104 = vmatpush1.msra.mxu0 0.0
    %105 = vmatprep.subr.mxu0 0.0
    %106 = vmatpush1.msra.mxu0 0.0
    %107 = vmatprep.subr.mxu0 0.0
    %108 = vmatpush1.msra.mxu0 0.0
    %109 = vmatprep.subr.mxu0 0.0
    %110 = vmatpush1.msra.mxu0 0.0
    %111 = vmatprep.subr.mxu0 0.0
    %112 = vmatpush1.msra.mxu0 0.0
    %113 = vmatprep.subr.mxu0 0.0
    %114 = vmatpush1.msra.mxu0 0.0
    %115 = vmatprep.subr.mxu0 0.0
    %116 = vmatpush1.msra.mxu0 0.0
    %117 = vmatprep.subr.mxu0 0.0
    %118 = vmatpush1.msra.mxu0 0.0
    %119 = vmatprep.mubr.f32.mxu0 0.0
    %120 = vmatmul.mubr.f32.gmra.mrb[0].mxu0 %v53
    %v121 = vpop.f32.mrb[0].mxu0
    %v122 = vadd.f32 0.0, %v121
    %v123 = vpop.f32.mrb[0].mxu0
    %124 = vdwg.mxu0
    %v125 = vld [vmem:[%s3] sm:$0xff]
    %v127 = vsel %vm39, %v122, 0
    %129 = vmatprep.subr.mxu0 0.0
    %130 = vmatpush1.msra.mxu0 %v125
    %131 = vmatprep.subr.mxu0 0.0
    %132 = vmatpush1.msra.mxu0 0.0
    %133 = vmatprep.subr.mxu0 0.0
    %134 = vmatpush1.msra.mxu0 0.0
    %135 = vmatprep.subr.mxu0 0.0
    %136 = vmatpush1.msra.mxu0 0.0
    %137 = vmatprep.subr.mxu0 0.0
    %138 = vmatpush1.msra.mxu0 0.0
    %139 = vmatprep.subr.mxu0 0.0
    %140 = vmatpush1.msra.mxu0 0.0
    %141 = vmatprep.subr.mxu0 0.0
    %142 = vmatpush1.msra.mxu0 0.0
    %143 = vmatprep.subr.mxu0 0.0
    %144 = vmatpush1.msra.mxu0 0.0
    %145 = vmatprep.subr.mxu0 0.0
    %146 = vmatpush1.msra.mxu0 0.0
    %147 = vmatprep.subr.mxu0 0.0
    %148 = vmatpush1.msra.mxu0 0.0
    %149 = vmatprep.subr.mxu0 0.0
    %150 = vmatpush1.msra.mxu0 0.0
    %151 = vmatprep.subr.mxu0 0.0
    %152 = vmatpush1.msra.mxu0 0.0
    %153 = vmatprep.subr.mxu0 0.0
    %154 = vmatpush1.msra.mxu0 0.0
    %155 = vmatprep.subr.mxu0 0.0
    %156 = vmatpush1.msra.mxu0 0.0
    %157 = vmatprep.subr.mxu0 0.0
    %158 = vmatpush1.msra.mxu0 0.0
    %159 = vmatprep.subr.mxu0 0.0
    %160 = vmatpush1.msra.mxu0 0.0
    %161 = vmatprep.subr.mxu0 0.0
    %162 = vmatpush1.msra.mxu0 0.0
    %163 = vmatprep.subr.mxu0 0.0
    %164 = vmatpush1.msra.mxu0 0.0
    %165 = vmatprep.subr.mxu0 0.0
    %166 = vmatpush1.msra.mxu0 0.0
    %167 = vmatprep.subr.mxu0 0.0
    %168 = vmatpush1.msra.mxu0 0.0
    %169 = vmatprep.subr.mxu0 0.0
    %170 = vmatpush1.msra.mxu0 0.0
    %171 = vmatprep.subr.mxu0 0.0
    %172 = vmatpush1.msra.mxu0 0.0
    %173 = vmatprep.subr.mxu0 0.0
    %174 = vmatpush1.msra.mxu0 0.0
    %175 = vmatprep.subr.mxu0 0.0
    %176 = vmatpush1.msra.mxu0 0.0
    %177 = vmatprep.subr.mxu0 0.0
    %178 = vmatpush1.msra.mxu0 0.0
    %179 = vmatprep.subr.mxu0 0.0
    %180 = vmatpush1.msra.mxu0 0.0
    %181 = vmatprep.subr.mxu0 0.0
    %182 = vmatpush1.msra.mxu0 0.0
    %183 = vmatprep.subr.mxu0 0.0
    %184 = vmatpush1.msra.mxu0 0.0
    %185 = vmatprep.subr.mxu0 0.0
    %186 = vmatpush1.msra.mxu0 0.0
    %187 = vmatprep.subr.mxu0 0.0
    %188 = vmatpush1.msra.mxu0 0.0
    %189 = vmatprep.subr.mxu0 0.0
    %190 = vmatpush1.msra.mxu0 0.0
    %191 = vmatprep.subr.mxu0 0.0
    %192 = vmatpush1.msra.mxu0 0.0
    %193 = vmatprep.mubr.f32.mxu0 0.0
    %194 = vmatmul.mubr.f32.gmra.mrb[0].mxu0 %v127
    %v195 = vpop.f32.mrb[0].mxu0
    %v196 = vadd.f32 0.0, %v195
    %v197 = vpop.f32.mrb[0].mxu0
    %198 = vdwg.mxu0
    %vm199 = vcmask 130048
    %200 = vst.msk [vmem:[#allocation5] sm:$0xff] %vm199, %v196
    // Predicated region
    $region22: #{tpu_custom_call.1} parent=1 // pred_check
      _
    $region23: #{tpu_custom_call.1} parent=1 // pred_check_branch
      %202 = sbr.rel (0) target = $region25
    $region24: #{tpu_custom_call.1} parent=1 // pred_region
      %s204 = ssub.s32 128, 128
      %205 = vsyncadd [#allocation4], %s204
      %s207 = sshll.u32 [#allocation5], 4
      %s208 = int_to_ptr.vmem [resolvable:$true] %s207
      %210 = dma.vmem_to_hbm [thread:$0]  %s208, 128, %s4, [#allocation4]
    $region25: #{tpu_custom_call.1} parent=1 // pred_fallthru
      _
    // Predicated region
    $region26: #{tpu_custom_call.1} parent=1 // pred_check
      _
    $region27: #{tpu_custom_call.1} parent=1 // pred_check_branch
      %212 = sbr.rel (0) target = $region29
    $region28: #{tpu_custom_call.1} parent=1 // pred_region
      %213 = dma.done [#allocation4], 128
    $region29: #{tpu_custom_call.1} parent=1 // pred_fallthru
      _
    %214 = vsyncpa [#allocation3], 1
    %215 = vsyncpa [#allocation4], 1

</llo_original>
